<compile_context>
chip_gen: v7x
topology: tpu7x:2x2x1
jax: 0.10.0
libtpu: 0.0.40
codegen_flags: <defaults>
</compile_context>

<pallas_src>
import functools

import jax
import jax.numpy as jnp
from jax.experimental import pallas as pl
from jax.experimental.pallas import tpu as pltpu


def _round_up(n, m):
    return -(-n // m) * m


# ---------------------------------------------------------------------------
# Kernels
# ---------------------------------------------------------------------------
def _visnet_fused_kernel(x_ref, w_ref, b_ref, o_ref, *, activation):
    """Whole problem in one grid step: o = act(x @ W' + b')."""
    y = jnp.dot(x_ref[...], w_ref[...], preferred_element_type=jnp.float32)
    y = y + b_ref[...]                       # Linear bias + folded BN shift
    if activation == "tanh":
        y = jnp.tanh(y)                      # EUP, f32
    elif activation == "relu":
        y = jnp.maximum(y, 0.0)              # VPU
    o_ref[...] = y.astype(o_ref.dtype)       # single lane-dense store


def _visnet_tiled_kernel(x_ref, w_ref, b_ref, o_ref, acc_ref, *, activation):
    """(tm, tn) output tile; K is the last ("arbitrary") grid axis."""
    @pl.when(pl.program_id(2) == 0)
    def _():
        acc_ref[...] = jnp.zeros_like(acc_ref)

    acc_ref[...] += jnp.dot(x_ref[...], w_ref[...],
                            preferred_element_type=jnp.float32)

    @pl.when(pl.program_id(2) == pl.num_programs(2) - 1)
    def _():
        y = acc_ref[...] + b_ref[...]
        if activation == "tanh":
            y = jnp.tanh(y)
        elif activation == "relu":
            y = jnp.maximum(y, 0.0)
        o_ref[...] = y.astype(o_ref.dtype)


# ---------------------------------------------------------------------------
# One-time parameter preparation (hoisted out of the per-call path)
# ---------------------------------------------------------------------------
def prepare_visnet_params(fc_w, fc_b, bn=None, *, mxu_dtype=jnp.float32):
    """Fold eval-mode BN into the Linear layer, transpose, pad feature dims.

    fc_w : (F_out, F_in)  torch nn.Linear weight layout.
    fc_b : (F_out,)
    bn   : None or dict(gamma, beta, mean, var, eps) for eval-mode BatchNorm1d.
    Returns (w_t, b) with w_t: (Kp, Np) in mxu_dtype, b: (1, Np) float32.
    """
    w = fc_w.astype(jnp.float32)
    b = fc_b.astype(jnp.float32)
    if bn is not None:
        # y = (x @ W^T + b) * s + t  ==  x @ (W*s)^T + (b*s + t)
        scale = bn["gamma"] / jnp.sqrt(bn["var"] + bn["eps"])
        w = w * scale[:, None]
        b = b * scale + (bn["beta"] - bn["mean"] * scale)
    w_t = jnp.transpose(w)                         # (F_in, F_out): lane-dense N
    F_in, F_out = w_t.shape
    Kp = _round_up(F_in, 128)
    Np = _round_up(F_out, 128)
    if (Kp, Np) != (F_in, F_out):
        w_t = jnp.pad(w_t, ((0, Kp - F_in), (0, Np - F_out)))
        b = jnp.pad(b, (0, Np - F_out))
    return w_t.astype(mxu_dtype), b.reshape(1, Np).astype(jnp.float32)


# ---------------------------------------------------------------------------
# Forward (jitted; only the activation input is per-call)
# ---------------------------------------------------------------------------
@functools.partial(
    jax.jit,
    static_argnames=("f_out", "activation", "force_tiled", "tm", "tn", "tk"))
def visnet_forward(x, w_t, b, *, f_out, activation="tanh",
                   force_tiled=False, tm=128, tn=256, tk=256):
    """VisNet forward: x (B, F_in) -> (B, f_out) in float32."""
    B, F_in = x.shape
    Kp, Np = w_t.shape
    mxu_dtype = w_t.dtype
    op_b = mxu_dtype.itemsize

    # --- choose single-step (whole problem in VMEM) vs tiled fallback -------
    Mp_single = _round_up(B, 8)
    single_vmem = 2 * ((Mp_single * Kp + Kp * Np) * op_b
                       + Np * 4 + Mp_single * Np * 4)
    use_single = (not force_tiled) and single_vmem <= (16 << 20)

    if use_single:
        Mp = Mp_single
        tk_, tn_ = Kp, Np
    else:
        Mp = _round_up(B, tm)
        tk_ = min(tk, Kp)
        while Kp % tk_:
            tk_ //= 2
        tn_ = min(tn, Np)
        while Np % tn_:
            tn_ //= 2

    xp = x.astype(mxu_dtype)
    if (Mp, Kp) != (B, F_in):
        xp = jnp.pad(xp, ((0, Mp - B), (0, Kp - F_in)))

    cost = pl.CostEstimate(
        flops=2 * Mp * Kp * Np,
        transcendentals=Mp * Np if activation == "tanh" else 0,
        bytes_accessed=Mp * Kp * op_b + Kp * Np * op_b + Np * 4 + Mp * Np * 4)

    if use_single:
        out = pl.pallas_call(
            functools.partial(_visnet_fused_kernel, activation=activation),
            out_shape=jax.ShapeDtypeStruct((Mp, Np), jnp.float32),
            grid=(1,),
            in_specs=[
                pl.BlockSpec((Mp, Kp), lambda i: (0, 0)),   # x (full)
                pl.BlockSpec((Kp, Np), lambda i: (0, 0)),   # W' (full)
                pl.BlockSpec((1, Np), lambda i: (0, 0)),    # bias (full)
            ],
            out_specs=pl.BlockSpec((Mp, Np), lambda i: (0, 0)),
            compiler_params=pltpu.CompilerParams(
                dimension_semantics=("arbitrary",)),
            cost_estimate=cost,
        )(xp, w_t, b)
    else:
        # Double-buffered inputs + output + accumulator, with headroom; keep
        # well under v7x's 64 MiB physical VMEM.
        vmem_need = (2 * (tm * tk_ + tk_ * tn_) * op_b + 2 * tn_ * 4
                     + 3 * tm * tn_ * 4)
        vmem_limit = min(max(2 * vmem_need, 16 << 20), 64 << 20)
        out = pl.pallas_call(
            functools.partial(_visnet_tiled_kernel, activation=activation),
            out_shape=jax.ShapeDtypeStruct((Mp, Np), jnp.float32),
            grid=(Mp // tm, Np // tn_, Kp // tk_),
            in_specs=[
                pl.BlockSpec((tm, tk_), lambda i, j, k: (i, k)),   # x tile
                pl.BlockSpec((tk_, tn_), lambda i, j, k: (k, j)),  # W' tile
                pl.BlockSpec((1, tn_), lambda i, j, k: (0, j)),    # bias tile
            ],
            out_specs=pl.BlockSpec((tm, tn_), lambda i, j, k: (i, j)),
            scratch_shapes=[pltpu.VMEM((tm, tn_), jnp.float32)],
            compiler_params=pltpu.CompilerParams(
                dimension_semantics=("parallel", "parallel", "arbitrary"),
                vmem_limit_bytes=vmem_limit),
            cost_estimate=cost,
        )(xp, w_t, b)

    return out[:B, :f_out]


# ---------------------------------------------------------------------------
# Pure-JAX reference (torch VisNet, eval mode)
# ---------------------------------------------------------------------------
def reference(x, fc_w, fc_b, bn, activation):
    y = x @ fc_w.T + fc_b
    if bn is not None:
        y = (y - bn["mean"]) / jnp.sqrt(bn["var"] + bn["eps"]) \
            * bn["gamma"] + bn["beta"]
    if activation == "tanh":
        y = jnp.tanh(y)
    elif activation == "relu":
        y = jnp.maximum(y, 0.0)
    return y


if __name__ == "__main__":
    # opt: vis_fc_layers = [256, 256], batch_norm=True, activation='tanh',
    #      dropout=0 (identity in eval mode).
    B, F_in, F_out = 16, 256, 256

    key = jax.random.PRNGKey(0)
    k_x, k_x2, k_w, k_g, k_be, k_m, k_v = jax.random.split(key, 7)

    x = jax.random.normal(k_x, (B, F_in), jnp.float32)
    bound = (6.0 / (F_in + F_out)) ** 0.5          # Xavier-uniform-ish Linear
    fc_w = jax.random.uniform(k_w, (F_out, F_in), jnp.float32, -bound, bound)
    fc_b = jnp.zeros((F_out,), jnp.float32)
    bn = {                                          # eval-mode BatchNorm1d
        "gamma": 1.0 + 0.1 * jax.random.normal(k_g, (F_out,), jnp.float32),
        "beta": 0.1 * jax.random.normal(k_be, (F_out,), jnp.float32),
        "mean": 0.1 * jax.random.normal(k_m, (F_out,), jnp.float32),
        "var": jnp.abs(jax.random.normal(k_v, (F_out,), jnp.float32)) + 0.5,
        "eps": 1e-5,
    }

    ref = reference(x, fc_w, fc_b, bn, "tanh")

    # 1) Exact f32-operand path: single grid step, one fused matmul+epilogue.
    w32, b32 = prepare_visnet_params(fc_w, fc_b, bn, mxu_dtype=jnp.float32)
    out = jax.block_until_ready(
        visnet_forward(x, w32, b32, f_out=F_out, activation="tanh"))
    assert out.shape == (B, F_out)
    assert jnp.allclose(out, ref, atol=1e-5, rtol=1e-5), \
        f"f32 max err {jnp.abs(out - ref).max()}"

    # 2) bf16 MXU-operand fast path (native MXU dtype on v5e/v6e/v7x),
    #    f32 accumulation + f32 epilogue; looser tolerance vs f32 reference.
    wbf, bbf = prepare_visnet_params(fc_w, fc_b, bn, mxu_dtype=jnp.bfloat16)
    out_bf = jax.block_until_ready(
        visnet_forward(x, wbf, bbf, f_out=F_out, activation="tanh"))
    assert jnp.allclose(out_bf, ref, atol=5e-2), \
        f"bf16 max err {jnp.abs(out_bf - ref).max()}"

    # 3) Tiled fallback for production batch sizes: tm=128 LHS tiles,
    #    parallel M/N grid axes (megacore-splittable on v7x).
    B2 = 256
    x2 = jax.random.normal(k_x2, (B2, F_in), jnp.float32)
    ref2 = reference(x2, fc_w, fc_b, bn, "tanh")
    out2 = jax.block_until_ready(
        visnet_forward(x2, w32, b32, f_out=F_out, activation="tanh",
                       force_tiled=True))
    assert out2.shape == (B2, F_out)
    assert jnp.allclose(out2, ref2, atol=1e-5, rtol=1e-5), \
        f"tiled max err {jnp.abs(out2 - ref2).max()}"

    print("KERNEL_OK")
</pallas_src>

<mosaic_0001>
module attributes {stable_mosaic.version = 11 : i64} {
  func.func @_visnet_fused_kernel(%arg0: i32, %arg1: memref<16x256xf32, #tpu.memory_space<vmem>>, %arg2: memref<256x256xf32, #tpu.memory_space<vmem>>, %arg3: memref<1x256xf32, #tpu.memory_space<vmem>>, %arg4: memref<16x256xf32, #tpu.memory_space<vmem>>) attributes {dimension_semantics = [#tpu.dimension_semantics<arbitrary>], iteration_bounds = array<i64: 1>, scalar_prefetch = 0 : i64, scratch_operands = 0 : i64, tpu.core_type = #tpu.core_type<tc>, window_params = [{pipeline_mode = #tpu.pipeline_mode<synchronous>, transform_indices = @transform_0, window_bounds = array<i64: 16, 256>}, {pipeline_mode = #tpu.pipeline_mode<synchronous>, transform_indices = @transform_1, window_bounds = array<i64: 256, 256>}, {pipeline_mode = #tpu.pipeline_mode<synchronous>, transform_indices = @transform_2, window_bounds = array<i64: 1, 256>}, {pipeline_mode = #tpu.pipeline_mode<synchronous>, transform_indices = @transform_3, window_bounds = array<i64: 16, 256>}]} {
    %c0 = arith.constant 0 : index
    %c0_0 = arith.constant 0 : index
    %0 = vector.load %arg1[%c0, %c0_0] : memref<16x256xf32, #tpu.memory_space<vmem>>, vector<16x256xf32>
    %c0_1 = arith.constant 0 : index
    %c0_2 = arith.constant 0 : index
    %1 = vector.load %arg2[%c0_1, %c0_2] : memref<256x256xf32, #tpu.memory_space<vmem>>, vector<256x256xf32>
    %cst = arith.constant dense<0.000000e+00> : vector<16x256xf32>
    %2 = tpu.matmul %0, %1, %cst {dimension_numbers = #tpu.dot_dimension_numbers<[1], [0], [0], [1], [0, 0, 1, 1], [], []>} : vector<16x256xf32>, vector<256x256xf32>, vector<16x256xf32> -> vector<16x256xf32>
    %c0_3 = arith.constant 0 : index
    %c0_4 = arith.constant 0 : index
    %3 = vector.load %arg3[%c0_3, %c0_4] : memref<1x256xf32, #tpu.memory_space<vmem>>, vector<1x256xf32>
    %4 = vector.broadcast %3 : vector<1x256xf32> to vector<16x256xf32>
    %5 = arith.addf %2, %4 : vector<16x256xf32>
    %6 = math.tanh %5 : vector<16x256xf32>
    %c0_5 = arith.constant 0 : index
    %c0_6 = arith.constant 0 : index
    %7 = vector.load %arg4[%c0_5, %c0_6] : memref<16x256xf32, #tpu.memory_space<vmem>>, vector<16x256xf32>
    tpu.vector_store %arg4[%c0_5, %c0_6], %6 {strides = array<i32>} : memref<16x256xf32, #tpu.memory_space<vmem>>, vector<16x256xf32>,
    return
  }
  func.func @transform_0(%arg0: i32) -> (i32, i32) {
    %c0_i32 = arith.constant 0 : i32
    %c0_i32_0 = arith.constant 0 : i32
    %c0_i32_1 = arith.constant 0 : i32
    return %c0_i32, %c0_i32_0 : i32, i32
  }
  func.func @transform_1(%arg0: i32) -> (i32, i32) {
    %c0_i32 = arith.constant 0 : i32
    %c0_i32_0 = arith.constant 0 : i32
    %c0_i32_1 = arith.constant 0 : i32
    return %c0_i32, %c0_i32_0 : i32, i32
  }
  func.func @transform_2(%arg0: i32) -> (i32, i32) {
    %c0_i32 = arith.constant 0 : i32
    %c0_i32_0 = arith.constant 0 : i32
    %c0_i32_1 = arith.constant 0 : i32
    return %c0_i32, %c0_i32_0 : i32, i32
  }
  func.func @transform_3(%arg0: i32) -> (i32, i32) {
    %c0_i32 = arith.constant 0 : i32
    %c0_i32_0 = arith.constant 0 : i32
    %c0_i32_1 = arith.constant 0 : i32
    return %c0_i32, %c0_i32_0 : i32, i32
  }
}

</mosaic_0001>

<llo_original>
// kernel: visnet_forward.1
$region0: #{visnet_forward.1}
  #allocation0 [shape = 'u32[]', space=smem, size = 0x4, offset = 0x4, fixed_abs, tag = 'smem constant byte address 0x4 - core index']
  #allocation1 [shape = 'u32[144,128]{1,0:T(1,128)}', space=vmem, size = 0x12000, scoped, tag = 'internal scratch']
  %s0 = inlined_call_operand.hbm [shape: f32[16,256], index: 0, kind: input, shape index: {}]
  %s1 = inlined_call_operand.hbm [shape: f32[256,256], index: 1, kind: input, shape index: {}]
  %s2 = inlined_call_operand.vmem [shape: f32[1,256], index: 2, kind: input, shape index: {}]
  %s3 = inlined_call_operand.hbm [shape: f32[16,256], index: 3, kind: output, shape index: {}]
  %s4 = sld [smem:[#allocation0]]
  $region30: #{visnet_forward.1} parent=0
    _
  %s6 = ssub.s32 1, %s4
  %s7 = scalar_select 0, %s6, %s4
  $region1: #{visnet_forward.1} parent=0
    #allocation2 [shape = 'u8[16384]{0}', space=vmem, size = 0x4000, scoped, tag = 'input window, operand 0, single buffered']
    #allocation3 [shape = 's32[1]{0}', space=sflag, size = 0x4, scoped, tag = 'scoped memory for visnet_forward.1']
    #allocation4 [shape = 's32[1]{0}', space=sflag, size = 0x4, scoped, tag = 'scoped memory for visnet_forward.1']
    #allocation5 [shape = 'u8[262144]{0}', space=vmem, size = 0x40000, scoped, tag = 'input window, operand 1, single buffered']
    #allocation6 [shape = 's32[1]{0}', space=sflag, size = 0x4, scoped, tag = 'scoped memory for visnet_forward.1']
    #allocation7 [shape = 'u8[16384]{0}', space=vmem, size = 0x4000, scoped, tag = 'output window, operand 0, single buffered']
    %8 = vsyncpa [#allocation3], 0
    %9 = vsyncpa [#allocation6], 0
    %10 = vsyncpa [#allocation4], 0
    // Predicated region
    $region2: #{visnet_forward.1} parent=1 // pred_check
      _
    $region3: #{visnet_forward.1} parent=1 // pred_check_branch
      %12 = sbr.rel (0) target = $region5
    $region4: #{visnet_forward.1} parent=1 // pred_region
      %s14 = ssub.s32 512, 512
      %15 = vsyncadd [#allocation3], %s14
      %s16 = sshll.u32 [#allocation2], 4
      %s17 = int_to_ptr.vmem [resolvable:$true] %s16
      %22 = dma.hbm_to_vmem [thread:$0]  %s0, 512, %s17, [#allocation3], 256, 256, 16
    $region5: #{visnet_forward.1} parent=1 // pred_fallthru
      _
    // Predicated region
    $region6: #{visnet_forward.1} parent=1 // pred_check
      _
    $region7: #{visnet_forward.1} parent=1 // pred_check_branch
      %24 = sbr.rel (0) target = $region9
    $region8: #{visnet_forward.1} parent=1 // pred_region
      %s26 = ssub.s32 8192, 8192
      %27 = vsyncadd [#allocation6], %s26
      %s28 = sshll.u32 [#allocation5], 4
      %s29 = int_to_ptr.vmem [resolvable:$true] %s28
      %34 = dma.hbm_to_vmem [thread:$0]  %s1, 8192, %s29, [#allocation6], 256, 256, 16
    $region9: #{visnet_forward.1} parent=1 // pred_fallthru
      _
    // Predicated region
    $region10: #{visnet_forward.1} parent=1 // pred_check
      _
    $region11: #{visnet_forward.1} parent=1 // pred_check_branch
      %36 = sbr.rel (0) target = $region13
    $region12: #{visnet_forward.1} parent=1 // pred_region
      _
    $region13: #{visnet_forward.1} parent=1 // pred_fallthru
      _
    // Predicated region
    $region14: #{visnet_forward.1} parent=1 // pred_check
      _
    $region15: #{visnet_forward.1} parent=1 // pred_check_branch
      %38 = sbr.rel (0) target = $region17
    $region16: #{visnet_forward.1} parent=1 // pred_region
      %39 = dma.done [#allocation3], 512
    $region17: #{visnet_forward.1} parent=1 // pred_fallthru
      _
    // Predicated region
    $region18: #{visnet_forward.1} parent=1 // pred_check
      _
    $region19: #{visnet_forward.1} parent=1 // pred_check_branch
      %41 = sbr.rel (0) target = $region21
    $region20: #{visnet_forward.1} parent=1 // pred_region
      %42 = dma.done [#allocation6], 8192
    $region21: #{visnet_forward.1} parent=1 // pred_fallthru
      _
    %v43 = vld [vmem:[#allocation2] sm:$0xff]
    %v44 = vld [vmem:[#allocation2 + $0x8] sm:$0xff]
    %v45 = vld [vmem:[#allocation2 + $0x10] sm:$0xff]
    %v46 = vld [vmem:[#allocation2 + $0x18] sm:$0xff]
    %v47 = vld [vmem:[#allocation5] sm:$0xff]
    %v48 = vld [vmem:[#allocation5 + $0x8] sm:$0xff]
    %v49 = vld [vmem:[#allocation5 + $0x10] sm:$0xff]
    %v50 = vld [vmem:[#allocation5 + $0x18] sm:$0xff]
    %v51 = vld [vmem:[#allocation5 + $0x20] sm:$0xff]
    %v52 = vld [vmem:[#allocation5 + $0x28] sm:$0xff]
    %v53 = vld [vmem:[#allocation5 + $0x30] sm:$0xff]
    %v54 = vld [vmem:[#allocation5 + $0x38] sm:$0xff]
    %v55 = vld [vmem:[#allocation5 + $0x40] sm:$0xff]
    %v56 = vld [vmem:[#allocation5 + $0x48] sm:$0xff]
    %v57 = vld [vmem:[#allocation5 + $0x50] sm:$0xff]
    %v58 = vld [vmem:[#allocation5 + $0x58] sm:$0xff]
    %v59 = vld [vmem:[#allocation5 + $0x60] sm:$0xff]
    %v60 = vld [vmem:[#allocation5 + $0x68] sm:$0xff]
    %v61 = vld [vmem:[#allocation5 + $0x70] sm:$0xff]
    %v62 = vld [vmem:[#allocation5 + $0x78] sm:$0xff]
    %v63 = vld [vmem:[#allocation5 + $0x80] sm:$0xff]
    %v64 = vld [vmem:[#allocation5 + $0x88] sm:$0xff]
    %v65 = vld [vmem:[#allocation5 + $0x90] sm:$0xff]
    %v66 = vld [vmem:[#allocation5 + $0x98] sm:$0xff]
    %v67 = vld [vmem:[#allocation5 + $0xa0] sm:$0xff]
    %v68 = vld [vmem:[#allocation5 + $0xa8] sm:$0xff]
    %v69 = vld [vmem:[#allocation5 + $0xb0] sm:$0xff]
    %v70 = vld [vmem:[#allocation5 + $0xb8] sm:$0xff]
    %v71 = vld [vmem:[#allocation5 + $0xc0] sm:$0xff]
    %v72 = vld [vmem:[#allocation5 + $0xc8] sm:$0xff]
    %v73 = vld [vmem:[#allocation5 + $0xd0] sm:$0xff]
    %v74 = vld [vmem:[#allocation5 + $0xd8] sm:$0xff]
    %v75 = vld [vmem:[#allocation5 + $0xe0] sm:$0xff]
    %v76 = vld [vmem:[#allocation5 + $0xe8] sm:$0xff]
    %v77 = vld [vmem:[#allocation5 + $0xf0] sm:$0xff]
    %v78 = vld [vmem:[#allocation5 + $0xf8] sm:$0xff]
    %v79 = vld [vmem:[#allocation5 + $0x100] sm:$0xff]
    %v80 = vld [vmem:[#allocation5 + $0x108] sm:$0xff]
    %v81 = vld [vmem:[#allocation5 + $0x110] sm:$0xff]
    %v82 = vld [vmem:[#allocation5 + $0x118] sm:$0xff]
    %v83 = vld [vmem:[#allocation5 + $0x120] sm:$0xff]
    %v84 = vld [vmem:[#allocation5 + $0x128] sm:$0xff]
    %v85 = vld [vmem:[#allocation5 + $0x130] sm:$0xff]
    %v86 = vld [vmem:[#allocation5 + $0x138] sm:$0xff]
    %v87 = vld [vmem:[#allocation5 + $0x140] sm:$0xff]
    %v88 = vld [vmem:[#allocation5 + $0x148] sm:$0xff]
    %v89 = vld [vmem:[#allocation5 + $0x150] sm:$0xff]
    %v90 = vld [vmem:[#allocation5 + $0x158] sm:$0xff]
    %v91 = vld [vmem:[#allocation5 + $0x160] sm:$0xff]
    %v92 = vld [vmem:[#allocation5 + $0x168] sm:$0xff]
    %v93 = vld [vmem:[#allocation5 + $0x170] sm:$0xff]
    %v94 = vld [vmem:[#allocation5 + $0x178] sm:$0xff]
    %v95 = vld [vmem:[#allocation5 + $0x180] sm:$0xff]
    %v96 = vld [vmem:[#allocation5 + $0x188] sm:$0xff]
    %v97 = vld [vmem:[#allocation5 + $0x190] sm:$0xff]
    %v98 = vld [vmem:[#allocation5 + $0x198] sm:$0xff]
    %v99 = vld [vmem:[#allocation5 + $0x1a0] sm:$0xff]
    %v100 = vld [vmem:[#allocation5 + $0x1a8] sm:$0xff]
    %v101 = vld [vmem:[#allocation5 + $0x1b0] sm:$0xff]
    %v102 = vld [vmem:[#allocation5 + $0x1b8] sm:$0xff]
    %v103 = vld [vmem:[#allocation5 + $0x1c0] sm:$0xff]
    %v104 = vld [vmem:[#allocation5 + $0x1c8] sm:$0xff]
    %v105 = vld [vmem:[#allocation5 + $0x1d0] sm:$0xff]
    %v106 = vld [vmem:[#allocation5 + $0x1d8] sm:$0xff]
    %v107 = vld [vmem:[#allocation5 + $0x1e0] sm:$0xff]
    %v108 = vld [vmem:[#allocation5 + $0x1e8] sm:$0xff]
    %v109 = vld [vmem:[#allocation5 + $0x1f0] sm:$0xff]
    %v110 = vld [vmem:[#allocation5 + $0x1f8] sm:$0xff]
    %v111 = vld [vmem:[%s2] sm:$0x3]
    %v113 = vlaneseq
    %v114 = vshrl.u32 %v113, 7
    %v115 = vsub.s32 0, %v114
    %v116 = vrot.slane %v111, %v115
    %v117 = vlaneseq
    %v118 = vshrl.u32 %v117, 7
    %v119 = vsub.s32 1, %v118
    %v120 = vrot.slane %v111, %v119
    %123 = vmatprep.subr.mxu0 %v48
    %124 = vmatpush1.msra.mxu0 %v47
    %125 = vmatprep.subr.mxu0 %v50
    %126 = vmatpush1.msra.mxu0 %v49
    %127 = vmatprep.subr.mxu0 %v52
    %128 = vmatpush1.msra.mxu0 %v51
    %129 = vmatprep.subr.mxu0 %v54
    %130 = vmatpush1.msra.mxu0 %v53
    %131 = vmatprep.subr.mxu0 %v56
    %132 = vmatpush1.msra.mxu0 %v55
    %133 = vmatprep.subr.mxu0 %v58
    %134 = vmatpush1.msra.mxu0 %v57
    %135 = vmatprep.subr.mxu0 %v60
    %136 = vmatpush1.msra.mxu0 %v59
    %137 = vmatprep.subr.mxu0 %v62
    %138 = vmatpush1.msra.mxu0 %v61
    %139 = vmatprep.subr.mxu0 %v64
    %140 = vmatpush1.msra.mxu0 %v63
    %141 = vmatprep.subr.mxu0 %v66
    %142 = vmatpush1.msra.mxu0 %v65
    %143 = vmatprep.subr.mxu0 %v68
    %144 = vmatpush1.msra.mxu0 %v67
    %145 = vmatprep.subr.mxu0 %v70
    %146 = vmatpush1.msra.mxu0 %v69
    %147 = vmatprep.subr.mxu0 %v72
    %148 = vmatpush1.msra.mxu0 %v71
    %149 = vmatprep.subr.mxu0 %v74
    %150 = vmatpush1.msra.mxu0 %v73
    %151 = vmatprep.subr.mxu0 %v76
    %152 = vmatpush1.msra.mxu0 %v75
    %153 = vmatprep.subr.mxu0 %v78
    %154 = vmatpush1.msra.mxu0 %v77
    %155 = vmatprep.subr.mxu0 %v80
    %156 = vmatpush1.msra.mxu0 %v79
    %157 = vmatprep.subr.mxu0 %v82
    %158 = vmatpush1.msra.mxu0 %v81
    %159 = vmatprep.subr.mxu0 %v84
    %160 = vmatpush1.msra.mxu0 %v83
    %161 = vmatprep.subr.mxu0 %v86
    %162 = vmatpush1.msra.mxu0 %v85
    %163 = vmatprep.subr.mxu0 %v88
    %164 = vmatpush1.msra.mxu0 %v87
    %165 = vmatprep.subr.mxu0 %v90
    %166 = vmatpush1.msra.mxu0 %v89
    %167 = vmatprep.subr.mxu0 %v92
    %168 = vmatpush1.msra.mxu0 %v91
    %169 = vmatprep.subr.mxu0 %v94
    %170 = vmatpush1.msra.mxu0 %v93
    %171 = vmatprep.subr.mxu0 %v96
    %172 = vmatpush1.msra.mxu0 %v95
    %173 = vmatprep.subr.mxu0 %v98
    %174 = vmatpush1.msra.mxu0 %v97
    %175 = vmatprep.subr.mxu0 %v100
    %176 = vmatpush1.msra.mxu0 %v99
    %177 = vmatprep.subr.mxu0 %v102
    %178 = vmatpush1.msra.mxu0 %v101
    %179 = vmatprep.subr.mxu0 %v104
    %180 = vmatpush1.msra.mxu0 %v103
    %181 = vmatprep.subr.mxu0 %v106
    %182 = vmatpush1.msra.mxu0 %v105
    %183 = vmatprep.subr.mxu0 %v108
    %184 = vmatpush1.msra.mxu0 %v107
    %185 = vmatprep.subr.mxu0 %v110
    %186 = vmatpush1.msra.mxu0 %v109
    %187 = vmatprep.mubr.f32.mxu0 %v44
    %188 = vmatmul.mubr.f32.gmra.mrb[0].mxu0 %v43
    %v189 = vpop.f32.mrb[0].mxu0
    %v190 = vadd.f32 %v116, %v189
    %v191 = vpop.f32.mrb[0].mxu0
    %v192 = vadd.f32 %v120, %v191
    %193 = vmatprep.mubr.f32.mxu0 %v46
    %194 = vmatmul.mubr.f32.gmra.mrb[0].mxu0 %v45
    %v195 = vpop.f32.mrb[0].mxu0
    %v196 = vadd.f32 %v116, %v195
    %v197 = vpop.f32.mrb[0].mxu0
    %v198 = vadd.f32 %v120, %v197
    %199 = vdwg.mxu0
    %v200 = vtanh.pop %v190
    %v201 = vtanh.pop %v192
    %v202 = vtanh.pop %v196
    %v203 = vtanh.pop %v198
    %204 = vst [vmem:[#allocation7] sm:$0xff] %v200
    %205 = vst [vmem:[#allocation7 + $0x8] sm:$0xff] %v201
    %206 = vst [vmem:[#allocation7 + $0x10] sm:$0xff] %v202
    %207 = vst [vmem:[#allocation7 + $0x18] sm:$0xff] %v203
    // Predicated region
    $region22: #{visnet_forward.1} parent=1 // pred_check
      _
    $region23: #{visnet_forward.1} parent=1 // pred_check_branch
      %209 = sbr.rel (0) target = $region25
    $region24: #{visnet_forward.1} parent=1 // pred_region
      %s211 = ssub.s32 512, 512
      %212 = vsyncadd [#allocation4], %s211
      %s213 = sshll.u32 [#allocation7], 4
      %s214 = int_to_ptr.vmem [resolvable:$true] %s213
      %219 = dma.vmem_to_hbm [thread:$0]  %s214, 512, %s3, [#allocation4], 256, 256, 16
    $region25: #{visnet_forward.1} parent=1 // pred_fallthru
      _
    // Predicated region
    $region26: #{visnet_forward.1} parent=1 // pred_check
      _
    $region27: #{visnet_forward.1} parent=1 // pred_check_branch
      %221 = sbr.rel (0) target = $region29
    $region28: #{visnet_forward.1} parent=1 // pred_region
      %222 = dma.done [#allocation4], 512
    $region29: #{visnet_forward.1} parent=1 // pred_fallthru
      _
    %223 = vsyncpa [#allocation3], 1
    %224 = vsyncpa [#allocation6], 1
    %225 = vsyncpa [#allocation4], 1

</llo_original>
